<compile_context>
chip_gen: v7x
topology: tpu7x:2x2x1
jax: 0.10.0
libtpu: 0.0.40
codegen_flags: <defaults>
</compile_context>

<pallas_src>
import math

import jax
import jax.numpy as jnp
from jax.experimental import pallas as pl
from jax.experimental.pallas import tpu as pltpu


def _make_kernel(use_acc_scratch):
    """Grid = (Mp//tm, Np//tn, Kp//tk); axis 2 (K) is the reduction axis.

    Refs (in order):
      s_ref:    (tm, rank) f32   precomputed (x @ A^T) * clamp(alpha)/sqrt(rank)
      x_ref:    (tm, tk)         activation tile
      w_ref:    (tk, tn)         frozen base weight tile, layout [in_dim, out_dim]
      bias_ref: (1,  tn)
      b_ref:    (rank, tn)
      o_ref:    (tm, tn)
      acc_ref:  (tm, tn) f32     scratch accumulator (only when output dtype != f32)
    """

    def kernel(s_ref, x_ref, w_ref, bias_ref, b_ref, o_ref, *scratch):
        k = pl.program_id(2)
        acc = scratch[0] if use_acc_scratch else o_ref

        @pl.when(k == 0)
        def _init():
            acc[...] = jnp.zeros_like(acc)

        # Pure base matmul on the K inner loop (the LoRA projection is no
        # longer recomputed here per K step / per N tile).
        acc[...] += jnp.dot(x_ref[...], w_ref[...],
                            preferred_element_type=jnp.float32)

        @pl.when(k == pl.num_programs(2) - 1)
        def _finish():
            # rank-sized contraction, once per (i, j) output tile.
            lora = jnp.dot(s_ref[...], b_ref[...].astype(jnp.float32),
                           preferred_element_type=jnp.float32)
            out = acc[...] + lora + bias_ref[...].astype(jnp.float32)
            o_ref[...] = out.astype(o_ref.dtype)

    return kernel


def _round_up(x, m):
    return ((x + m - 1) // m) * m


def _pick_tile(dim, want, align):
    """Full extent for small dims (always layout-legal); otherwise the aligned
    default tile (the dim is then explicitly padded to a multiple of it)."""
    if dim <= want:
        return dim
    return max(align, (want // align) * align)


def _tile_vmem_bytes(rows, cols, itemsize):
    """Physical VMEM bytes of one (rows, cols) tile incl. sublane/lane padding."""
    sub = 8 * max(1, 4 // itemsize)          # 8 rows f32 / 16 bf16 / 32 int8
    rp = _round_up(max(rows, 1), sub)
    cp = _round_up(max(cols, 1), 128)
    return rp * cp * itemsize


def lora_qproj(x, w, bias, a_vectors, b_vectors, alpha, rank,
               *, tm=512, tn=512, tk=512):
    """x: (B, T, in_dim) -> (B, T, out_dim). Heavy math in one tiled Pallas kernel."""
    B, T, in_dim = x.shape
    out_dim = w.shape[1]
    M, K, N = B * T, in_dim, out_dim
    dtype = x.dtype
    dsize = dtype.itemsize

    # ---------------- wrapper-side prep ----------------
    x_2d = x.reshape(M, K)
    bias_2d = bias.reshape(1, N)

    # LoRA projection s = x @ A^T, scaled by clamp(alpha)/sqrt(rank).  rank is
    # tiny (<= 8), so doing this once in the wrapper keeps the lane-sparse
    # (K, rank) matmul off the kernel's MXU inner loop entirely.
    alpha_scaled = (jnp.clip(alpha, 1e-7, 100.0).astype(jnp.float32)
                    * (1.0 / math.sqrt(rank))).reshape(1, rank)
    s_scaled = jnp.dot(x_2d, a_vectors.T,
                       preferred_element_type=jnp.float32,
                       precision=jax.lax.Precision.HIGHEST) * alpha_scaled  # (M, rank) f32

    # ---------------- tiles + explicit padding ----------------
    m_align = 8 * max(1, 4 // dsize)          # 8 f32 / 16 bf16 / 32 int8-fp8
    tm = _pick_tile(M, tm, m_align)
    tn = _pick_tile(N, tn, 128)
    tk = _pick_tile(K, tk, 128)
    Mp, Np, Kp = _round_up(M, tm), _round_up(N, tn), _round_up(K, tk)

    if (Mp, Kp) != (M, K):
        x_2d = jnp.pad(x_2d, ((0, Mp - M), (0, Kp - K)))
    if Mp != M:
        s_scaled = jnp.pad(s_scaled, ((0, Mp - M), (0, 0)))
    if (Kp, Np) != (K, N):
        w = jnp.pad(w, ((0, Kp - K), (0, Np - N)))
    if Np != N:
        bias_2d = jnp.pad(bias_2d, ((0, 0), (0, Np - N)))
        b_vectors = jnp.pad(b_vectors, ((0, 0), (0, Np - N)))

    grid = (Mp // tm, Np // tn, Kp // tk)

    # f32 outputs accumulate directly into the VMEM-resident output tile; other
    # dtypes get a dedicated f32 scratch accumulator.
    use_acc_scratch = dtype != jnp.float32
    scratch_shapes = [pltpu.VMEM((tm, tn), jnp.float32)] if use_acc_scratch else []

    # ---------------- VMEM accounting (padded sizes, double-buffered) -------
    vmem_needed = (
        2 * (_tile_vmem_bytes(tm, tk, dsize)        # x
             + _tile_vmem_bytes(tk, tn, dsize)      # W
             + _tile_vmem_bytes(1, tn, dsize)       # bias
             + _tile_vmem_bytes(rank, tn, dsize)    # B
             + _tile_vmem_bytes(tm, rank, 4))       # s (rank lane-padded to 128)
        + 2 * _tile_vmem_bytes(tm, tn, dsize)       # output
        + (_tile_vmem_bytes(tm, tn, 4) if use_acc_scratch else 0))
    vmem_limit = int(min(max(2 * vmem_needed, 16 * 1024 * 1024),
                         56 * 1024 * 1024))         # stay inside v7x's 64 MiB/TC

    cost = pl.CostEstimate(
        flops=2 * Mp * Kp * Np + 2 * Mp * rank * Np,
        transcendentals=0,
        bytes_accessed=(dsize * (Mp * Kp + Kp * Np + Mp * Np + rank * Np + Np)
                        + 4 * Mp * rank),
    )

    out_2d = pl.pallas_call(
        _make_kernel(use_acc_scratch),
        out_shape=jax.ShapeDtypeStruct((Mp, Np), dtype),
        grid_spec=pltpu.PrefetchScalarGridSpec(
            num_scalar_prefetch=0,
            grid=grid,
            in_specs=[
                pl.BlockSpec((tm, rank), lambda i, j, k: (i, 0)),   # s (per-i only)
                pl.BlockSpec((tm, tk), lambda i, j, k: (i, k)),     # x
                pl.BlockSpec((tk, tn), lambda i, j, k: (k, j)),     # W (frozen base)
                pl.BlockSpec((1, tn), lambda i, j, k: (0, j)),      # bias
                pl.BlockSpec((rank, tn), lambda i, j, k: (0, j)),   # B
            ],
            out_specs=pl.BlockSpec((tm, tn), lambda i, j, k: (i, j)),
            scratch_shapes=scratch_shapes,
        ),
        compiler_params=pltpu.CompilerParams(
            dimension_semantics=("parallel", "parallel", "arbitrary"),
            vmem_limit_bytes=vmem_limit,
        ),
        cost_estimate=cost,
    )(s_scaled, x_2d, w, bias_2d, b_vectors)

    if (Mp, Np) != (M, N):
        out_2d = out_2d[:M, :N]
    return out_2d.reshape(B, T, N)


def reference_lora_qproj(x, w, bias, a_vectors, b_vectors, alpha, rank):
    """Pure-JAX (f32) reference mirroring PyTorch RankOneLoRAWithGating.forward."""
    B, T, in_dim = x.shape
    out_dim = w.shape[1]
    f32 = jnp.float32
    hp = jax.lax.Precision.HIGHEST
    x_2d = x.reshape(B * T, in_dim).astype(f32)
    base_2d = jnp.dot(x_2d, w.astype(f32), precision=hp) + bias.astype(f32)  # addmm
    s = jnp.dot(x_2d, a_vectors.T.astype(f32), precision=hp)                 # (BT, rank)
    alpha_c = jnp.clip(alpha.astype(f32), 1e-7, 100.0)
    scale = 1.0 / math.sqrt(rank)
    lora_2d = jnp.sum(
        s[:, :, None] * b_vectors.astype(f32)[None, :, :] * alpha_c[None, :, None] * scale,
        axis=1,
    )
    return (base_2d + lora_2d).reshape(B, T, out_dim)


if __name__ == "__main__":
    def make_inputs(key, B, T, in_dim, out_dim, rank, dtype=jnp.float32):
        kx, kw, kb, ka, kbv = jax.random.split(key, 5)
        x = jax.random.normal(kx, (B, T, in_dim), dtype=dtype)
        w = jax.random.normal(kw, (in_dim, out_dim), dtype=dtype) * 0.05   # frozen base weight
        bias = jax.random.normal(kb, (out_dim,), dtype=dtype) * 0.05       # base bias
        a = jax.random.normal(ka, (rank, in_dim), dtype=dtype) * 0.1
        b = jax.random.normal(kbv, (rank, out_dim), dtype=dtype) * 0.1
        alpha = jnp.ones((rank,), dtype=dtype)                             # within clamp range
        return x, w, bias, a, b, alpha

    key = jax.random.PRNGKey(0)
    k1, k2, k3 = jax.random.split(key, 3)
    rank = 8

    # Case 1: tiny shapes consistent with the module's forward -> single-block grid.
    B, T, in_dim, out_dim = 2, 8, 32, 32
    args1 = make_inputs(k1, B, T, in_dim, out_dim, rank)
    out1 = jax.block_until_ready(lora_qproj(*args1, rank=rank))
    ref1 = reference_lora_qproj(*args1, rank=rank)
    assert out1.shape == (B, T, out_dim)
    assert jnp.allclose(out1.astype(jnp.float32), ref1, atol=1e-2, rtol=1e-2), \
        "case 1 mismatch vs reference"

    # Case 2: multi-tile (i, j, k) grid with M padding (24 -> 32) exercising the
    # K-accumulator path (f32 -> direct accumulation into the output tile).
    B2, T2, in2, out2_dim = 2, 12, 256, 256
    args2 = make_inputs(k2, B2, T2, in2, out2_dim, rank)
    out2 = jax.block_until_ready(
        lora_qproj(*args2, rank=rank, tm=16, tn=128, tk=128))   # grid (2, 2, 2)
    ref2 = reference_lora_qproj(*args2, rank=rank)
    assert out2.shape == (B2, T2, out2_dim)
    assert jnp.allclose(out2.astype(jnp.float32), ref2, atol=1e-2, rtol=1e-2), \
        "case 2 mismatch vs reference"

    # Case 3: bf16 path (f32 scratch accumulator variant, multi-K grid).
    B3, T3, in3, out3_dim = 2, 8, 256, 128
    args3 = make_inputs(k3, B3, T3, in3, out3_dim, rank, dtype=jnp.bfloat16)
    out3 = jax.block_until_ready(
        lora_qproj(*args3, rank=rank, tm=16, tn=128, tk=128))   # grid (1, 1, 2)
    ref3 = reference_lora_qproj(*args3, rank=rank)
    assert out3.shape == (B3, T3, out3_dim)
    assert jnp.allclose(out3.astype(jnp.float32), ref3, atol=5e-2, rtol=5e-2), \
        "case 3 mismatch vs reference"

    print("KERNEL_OK")
</pallas_src>

<mosaic_0001>
module attributes {stable_mosaic.version = 11 : i64} {
  func.func @kernel(%arg0: i32, %arg1: i32, %arg2: i32, %arg3: memref<16x8xf32, #tpu.memory_space<vmem>>, %arg4: memref<16x32xf32, #tpu.memory_space<vmem>>, %arg5: memref<32x32xf32, #tpu.memory_space<vmem>>, %arg6: memref<1x32xf32, #tpu.memory_space<vmem>>, %arg7: memref<8x32xf32, #tpu.memory_space<vmem>>, %arg8: memref<16x32xf32, #tpu.memory_space<vmem>>) attributes {dimension_semantics = [#tpu.dimension_semantics<parallel>, #tpu.dimension_semantics<parallel>, #tpu.dimension_semantics<arbitrary>], iteration_bounds = array<i64: 1, 1, 1>, scalar_prefetch = 0 : i64, scratch_operands = 0 : i64, tpu.core_type = #tpu.core_type<tc>, window_params = [{transform_indices = @transform_0, window_bounds = array<i64: 16, 8>}, {transform_indices = @transform_1, window_bounds = array<i64: 16, 32>}, {transform_indices = @transform_2, window_bounds = array<i64: 32, 32>}, {transform_indices = @transform_3, window_bounds = array<i64: 1, 32>}, {transform_indices = @transform_4, window_bounds = array<i64: 8, 32>}, {transform_indices = @transform_5, window_bounds = array<i64: 16, 32>}]} {
    %c0_i32 = arith.constant 0 : i32
    %0 = arith.cmpi eq, %arg2, %c0_i32 : i32
    %1 = arith.extui %0 : i1 to i32
    %c0_i32_0 = arith.constant 0 : i32
    %2 = arith.cmpi ne, %1, %c0_i32_0 : i32
    scf.if %2 {
      %cst_10 = arith.constant 0.000000e+00 : f32
      %12 = vector.broadcast %cst_10 : f32 to vector<16x32xf32>
      %c0_11 = arith.constant 0 : index
      %c0_12 = arith.constant 0 : index
      %13 = vector.load %arg8[%c0_11, %c0_12] : memref<16x32xf32, #tpu.memory_space<vmem>>, vector<16x32xf32>
      tpu.vector_store %arg8[%c0_11, %c0_12], %12 {strides = array<i32>} : memref<16x32xf32, #tpu.memory_space<vmem>>, vector<16x32xf32>,
    } else {
    }
    %c0 = arith.constant 0 : index
    %c0_1 = arith.constant 0 : index
    %3 = vector.load %arg8[%c0, %c0_1] : memref<16x32xf32, #tpu.memory_space<vmem>>, vector<16x32xf32>
    %c0_2 = arith.constant 0 : index
    %c0_3 = arith.constant 0 : index
    %4 = vector.load %arg4[%c0_2, %c0_3] : memref<16x32xf32, #tpu.memory_space<vmem>>, vector<16x32xf32>
    %c0_4 = arith.constant 0 : index
    %c0_5 = arith.constant 0 : index
    %5 = vector.load %arg5[%c0_4, %c0_5] : memref<32x32xf32, #tpu.memory_space<vmem>>, vector<32x32xf32>
    %cst = arith.constant dense<0.000000e+00> : vector<16x32xf32>
    %6 = tpu.matmul %4, %5, %cst {dimension_numbers = #tpu.dot_dimension_numbers<[1], [0], [0], [1], [0, 0, 1, 1], [], []>} : vector<16x32xf32>, vector<32x32xf32>, vector<16x32xf32> -> vector<16x32xf32>
    %7 = arith.addf %3, %6 : vector<16x32xf32>
    %c0_6 = arith.constant 0 : index
    %c0_7 = arith.constant 0 : index
    %8 = vector.load %arg8[%c0_6, %c0_7] : memref<16x32xf32, #tpu.memory_space<vmem>>, vector<16x32xf32>
    tpu.vector_store %arg8[%c0_6, %c0_7], %7 {strides = array<i32>} : memref<16x32xf32, #tpu.memory_space<vmem>>, vector<16x32xf32>,
    %c0_i32_8 = arith.constant 0 : i32
    %9 = arith.cmpi eq, %arg2, %c0_i32_8 : i32
    %10 = arith.extui %9 : i1 to i32
    %c0_i32_9 = arith.constant 0 : i32
    %11 = arith.cmpi ne, %10, %c0_i32_9 : i32
    scf.if %11 {
      %c0_10 = arith.constant 0 : index
      %c0_11 = arith.constant 0 : index
      %12 = vector.load %arg3[%c0_10, %c0_11] : memref<16x8xf32, #tpu.memory_space<vmem>>, vector<16x8xf32>
      %c0_12 = arith.constant 0 : index
      %c0_13 = arith.constant 0 : index
      %13 = vector.load %arg7[%c0_12, %c0_13] : memref<8x32xf32, #tpu.memory_space<vmem>>, vector<8x32xf32>
      %cst_14 = arith.constant dense<0.000000e+00> : vector<16x32xf32>
      %14 = tpu.matmul %12, %13, %cst_14 {dimension_numbers = #tpu.dot_dimension_numbers<[1], [0], [0], [1], [0, 0, 1, 1], [], []>} : vector<16x8xf32>, vector<8x32xf32>, vector<16x32xf32> -> vector<16x32xf32>
      %c0_15 = arith.constant 0 : index
      %c0_16 = arith.constant 0 : index
      %15 = vector.load %arg8[%c0_15, %c0_16] : memref<16x32xf32, #tpu.memory_space<vmem>>, vector<16x32xf32>
      %16 = arith.addf %15, %14 : vector<16x32xf32>
      %c0_17 = arith.constant 0 : index
      %c0_18 = arith.constant 0 : index
      %17 = vector.load %arg6[%c0_17, %c0_18] : memref<1x32xf32, #tpu.memory_space<vmem>>, vector<1x32xf32>
      %18 = vector.broadcast %17 : vector<1x32xf32> to vector<16x32xf32>
      %19 = arith.addf %16, %18 : vector<16x32xf32>
      %c0_19 = arith.constant 0 : index
      %c0_20 = arith.constant 0 : index
      %20 = vector.load %arg8[%c0_19, %c0_20] : memref<16x32xf32, #tpu.memory_space<vmem>>, vector<16x32xf32>
      tpu.vector_store %arg8[%c0_19, %c0_20], %19 {strides = array<i32>} : memref<16x32xf32, #tpu.memory_space<vmem>>, vector<16x32xf32>,
    } else {
    }
    return
  }
  func.func @transform_0(%arg0: i32, %arg1: i32, %arg2: i32) -> (i32, i32) {
    %c0_i32 = arith.constant 0 : i32
    %c0_i32_0 = arith.constant 0 : i32
    return %arg0, %c0_i32 : i32, i32
  }
  func.func @transform_1(%arg0: i32, %arg1: i32, %arg2: i32) -> (i32, i32) {
    %c0_i32 = arith.constant 0 : i32
    return %arg0, %arg2 : i32, i32
  }
  func.func @transform_2(%arg0: i32, %arg1: i32, %arg2: i32) -> (i32, i32) {
    %c0_i32 = arith.constant 0 : i32
    return %arg2, %arg1 : i32, i32
  }
  func.func @transform_3(%arg0: i32, %arg1: i32, %arg2: i32) -> (i32, i32) {
    %c0_i32 = arith.constant 0 : i32
    %c0_i32_0 = arith.constant 0 : i32
    return %c0_i32, %arg1 : i32, i32
  }
  func.func @transform_4(%arg0: i32, %arg1: i32, %arg2: i32) -> (i32, i32) {
    %c0_i32 = arith.constant 0 : i32
    %c0_i32_0 = arith.constant 0 : i32
    return %c0_i32, %arg1 : i32, i32
  }
  func.func @transform_5(%arg0: i32, %arg1: i32, %arg2: i32) -> (i32, i32) {
    %c0_i32 = arith.constant 0 : i32
    return %arg0, %arg1 : i32, i32
  }
}

</mosaic_0001>

<llo_original>
// kernel: tpu_custom_call.1
$region0: #{tpu_custom_call.1}
  #allocation0 [shape = 'u32[]', space=smem, size = 0x4, offset = 0x4, fixed_abs, tag = 'smem constant byte address 0x4 - core index']
  #allocation1 [shape = 'u32[144,128]{1,0:T(1,128)}', space=vmem, size = 0x12000, scoped, tag = 'internal scratch']
  %s0 = inlined_call_operand.vmem [shape: f32[16,8], index: 0, kind: input, shape index: {}]
  %s1 = inlined_call_operand.vmem [shape: f32[16,32], index: 1, kind: input, shape index: {}]
  %s2 = inlined_call_operand.hbm [shape: f32[32,32], index: 2, kind: input, shape index: {}]
  %s3 = inlined_call_operand.vmem [shape: f32[1,32], index: 3, kind: input, shape index: {}]
  %s4 = inlined_call_operand.vmem [shape: f32[8,32], index: 4, kind: input, shape index: {}]
  %s5 = inlined_call_operand.hbm [shape: f32[16,32], index: 5, kind: output, shape index: {}]
  %s6 = sld [smem:[#allocation0]]
  $region42: #{tpu_custom_call.1} parent=0
    _
  %s8 = ssub.s32 1, %s6
  %s9 = scalar_select 0, %s8, %s6
  $region1: #{tpu_custom_call.1} parent=0
    #allocation2 [shape = 'u8[16384]{0}', space=vmem, size = 0x4000, scoped, tag = 'input window, operand 2, single buffered']
    #allocation3 [shape = 's32[1]{0}', space=sflag, size = 0x4, scoped, tag = 'scoped memory for tpu_custom_call.1']
    #allocation4 [shape = 's32[1]{0}', space=sflag, size = 0x4, scoped, tag = 'scoped memory for tpu_custom_call.1']
    #allocation5 [shape = 'u8[8192]{0}', space=vmem, size = 0x2000, scoped, tag = 'output window, operand 0, single buffered']
    %10 = vsyncpa [#allocation3], 0
    %11 = vsyncpa [#allocation4], 0
    // Predicated region
    $region2: #{tpu_custom_call.1} parent=1 // pred_check
      _
    $region3: #{tpu_custom_call.1} parent=1 // pred_check_branch
      %13 = sbr.rel (0) target = $region5
    $region4: #{tpu_custom_call.1} parent=1 // pred_region
      _
    $region5: #{tpu_custom_call.1} parent=1 // pred_fallthru
      _
    // Predicated region
    $region6: #{tpu_custom_call.1} parent=1 // pred_check
      _
    $region7: #{tpu_custom_call.1} parent=1 // pred_check_branch
      %15 = sbr.rel (0) target = $region9
    $region8: #{tpu_custom_call.1} parent=1 // pred_region
      _
    $region9: #{tpu_custom_call.1} parent=1 // pred_fallthru
      _
    // Predicated region
    $region10: #{tpu_custom_call.1} parent=1 // pred_check
      _
    $region11: #{tpu_custom_call.1} parent=1 // pred_check_branch
      %17 = sbr.rel (0) target = $region13
    $region12: #{tpu_custom_call.1} parent=1 // pred_region
      %s19 = ssub.s32 512, 512
      %20 = vsyncadd [#allocation3], %s19
      %s21 = sshll.u32 [#allocation2], 4
      %s22 = int_to_ptr.vmem [resolvable:$true] %s21
      %27 = dma.hbm_to_vmem [thread:$0]  %s2, 512, %s22, [#allocation3], 128, 128, 8
    $region13: #{tpu_custom_call.1} parent=1 // pred_fallthru
      _
    // Predicated region
    $region14: #{tpu_custom_call.1} parent=1 // pred_check
      _
    $region15: #{tpu_custom_call.1} parent=1 // pred_check_branch
      %29 = sbr.rel (0) target = $region17
    $region16: #{tpu_custom_call.1} parent=1 // pred_region
      _
    $region17: #{tpu_custom_call.1} parent=1 // pred_fallthru
      _
    // Predicated region
    $region18: #{tpu_custom_call.1} parent=1 // pred_check
      _
    $region19: #{tpu_custom_call.1} parent=1 // pred_check_branch
      %31 = sbr.rel (0) target = $region21
    $region20: #{tpu_custom_call.1} parent=1 // pred_region
      _
    $region21: #{tpu_custom_call.1} parent=1 // pred_fallthru
      _
    // Predicated region
    $region22: #{tpu_custom_call.1} parent=1 // pred_check
      _
    $region23: #{tpu_custom_call.1} parent=1 // pred_check_branch
      %33 = sbr.rel (0) target = $region25
    $region24: #{tpu_custom_call.1} parent=1 // pred_region
      %34 = dma.done [#allocation3], 512
    $region25: #{tpu_custom_call.1} parent=1 // pred_fallthru
      _
    %p35 = scmp.eq.s32.totalorder 0, 0
    // Predicated region
    $region26: #{tpu_custom_call.1} parent=1 // pred_check
      %p36 = pneg %p35
    $region27: #{tpu_custom_call.1} parent=1 // pred_check_branch
      %38 = sbr.rel (%p36) target = $region29
    $region28: #{tpu_custom_call.1} parent=1 // pred_region
      %vm39 = vcmask 261120
      %40 = vst.msk [vmem:[#allocation5] sm:$0xff] %vm39, 0.0
      %41 = vst.msk [vmem:[#allocation5 + $0x8] sm:$0xff] %vm39, 0.0
    $region29: #{tpu_custom_call.1} parent=1 // pred_fallthru
      _
    %v42 = vld [vmem:[#allocation5] sm:$0xff]
    %v43 = vld [vmem:[#allocation5 + $0x8] sm:$0xff]
    %v44 = vld [vmem:[%s1] sm:$0xff]
    %v45 = vld [vmem:[%s1 + $0x8] sm:$0xff]
    %v46 = vld [vmem:[#allocation2] sm:$0xff]
    %v47 = vld [vmem:[#allocation2 + $0x8] sm:$0xff]
    %v48 = vld [vmem:[#allocation2 + $0x10] sm:$0xff]
    %v49 = vld [vmem:[#allocation2 + $0x18] sm:$0xff]
    %vm50 = vcmask 261120
    %v52 = vsel %vm50, %v44, 0
    %v55 = vsel %vm50, %v45, 0
    %57 = vmatprep.subr.mxu0 0.0
    %58 = vmatpush1.msra.mxu0 %v46
    %59 = vmatprep.subr.mxu0 0.0
    %60 = vmatpush1.msra.mxu0 %v47
    %61 = vmatprep.subr.mxu0 0.0
    %62 = vmatpush1.msra.mxu0 %v48
    %63 = vmatprep.subr.mxu0 0.0
    %64 = vmatpush1.msra.mxu0 %v49
    %65 = vmatprep.subr.mxu0 0.0
    %66 = vmatpush1.msra.mxu0 0.0
    %67 = vmatprep.subr.mxu0 0.0
    %68 = vmatpush1.msra.mxu0 0.0
    %69 = vmatprep.subr.mxu0 0.0
    %70 = vmatpush1.msra.mxu0 0.0
    %71 = vmatprep.subr.mxu0 0.0
    %72 = vmatpush1.msra.mxu0 0.0
    %73 = vmatprep.subr.mxu0 0.0
    %74 = vmatpush1.msra.mxu0 0.0
    %75 = vmatprep.subr.mxu0 0.0
    %76 = vmatpush1.msra.mxu0 0.0
    %77 = vmatprep.subr.mxu0 0.0
    %78 = vmatpush1.msra.mxu0 0.0
    %79 = vmatprep.subr.mxu0 0.0
    %80 = vmatpush1.msra.mxu0 0.0
    %81 = vmatprep.subr.mxu0 0.0
    %82 = vmatpush1.msra.mxu0 0.0
    %83 = vmatprep.subr.mxu0 0.0
    %84 = vmatpush1.msra.mxu0 0.0
    %85 = vmatprep.subr.mxu0 0.0
    %86 = vmatpush1.msra.mxu0 0.0
    %87 = vmatprep.subr.mxu0 0.0
    %88 = vmatpush1.msra.mxu0 0.0
    %89 = vmatprep.subr.mxu0 0.0
    %90 = vmatpush1.msra.mxu0 0.0
    %91 = vmatprep.subr.mxu0 0.0
    %92 = vmatpush1.msra.mxu0 0.0
    %93 = vmatprep.subr.mxu0 0.0
    %94 = vmatpush1.msra.mxu0 0.0
    %95 = vmatprep.subr.mxu0 0.0
    %96 = vmatpush1.msra.mxu0 0.0
    %97 = vmatprep.subr.mxu0 0.0
    %98 = vmatpush1.msra.mxu0 0.0
    %99 = vmatprep.subr.mxu0 0.0
    %100 = vmatpush1.msra.mxu0 0.0
    %101 = vmatprep.subr.mxu0 0.0
    %102 = vmatpush1.msra.mxu0 0.0
    %103 = vmatprep.subr.mxu0 0.0
    %104 = vmatpush1.msra.mxu0 0.0
    %105 = vmatprep.subr.mxu0 0.0
    %106 = vmatpush1.msra.mxu0 0.0
    %107 = vmatprep.subr.mxu0 0.0
    %108 = vmatpush1.msra.mxu0 0.0
    %109 = vmatprep.subr.mxu0 0.0
    %110 = vmatpush1.msra.mxu0 0.0
    %111 = vmatprep.subr.mxu0 0.0
    %112 = vmatpush1.msra.mxu0 0.0
    %113 = vmatprep.subr.mxu0 0.0
    %114 = vmatpush1.msra.mxu0 0.0
    %115 = vmatprep.subr.mxu0 0.0
    %116 = vmatpush1.msra.mxu0 0.0
    %117 = vmatprep.subr.mxu0 0.0
    %118 = vmatpush1.msra.mxu0 0.0
    %119 = vmatprep.subr.mxu0 0.0
    %120 = vmatpush1.msra.mxu0 0.0
    %121 = vmatprep.mubr.f32.mxu0 0.0
    %122 = vmatmul.mubr.f32.gmra.mrb[0].mxu0 %v52
    %v123 = vpop.f32.mrb[0].mxu0
    %v124 = vadd.f32 0.0, %v123
    %v125 = vpop.f32.mrb[0].mxu0
    %126 = vmatprep.mubr.f32.mxu0 0.0
    %127 = vmatmul.mubr.f32.gmra.mrb[0].mxu0 %v55
    %v128 = vpop.f32.mrb[0].mxu0
    %v129 = vadd.f32 0.0, %v128
    %v130 = vpop.f32.mrb[0].mxu0
    %131 = vdwg.mxu0
    %v132 = vadd.f32 %v42, %v124
    %v133 = vadd.f32 %v43, %v129
    %134 = vst.msk [vmem:[#allocation5] sm:$0xff] %vm50, %v132
    %135 = vst.msk [vmem:[#allocation5 + $0x8] sm:$0xff] %vm50, %v133
    // Predicated region
    $region30: #{tpu_custom_call.1} parent=1 // pred_check
      %p136 = pneg %p35
    $region31: #{tpu_custom_call.1} parent=1 // pred_check_branch
      %138 = sbr.rel (%p136) target = $region33
    $region32: #{tpu_custom_call.1} parent=1 // pred_region
      %v139 = vld [vmem:[%s0] sm:$0xff]
      %v140 = vld [vmem:[%s0 + $0x8] sm:$0xff]
      %v141 = vld [vmem:[%s4] sm:$0xff]
      %vm142 = vcmask 64512
      %v144 = vsel %vm142, %v139, 0
      %v147 = vsel %vm142, %v140, 0
      %149 = vmatprep.subr.mxu0 0.0
      %150 = vmatpush1.msra.mxu0 %v141
      %151 = vmatprep.subr.mxu0 0.0
      %152 = vmatpush1.msra.mxu0 0.0
      %153 = vmatprep.subr.mxu0 0.0
      %154 = vmatpush1.msra.mxu0 0.0
      %155 = vmatprep.subr.mxu0 0.0
      %156 = vmatpush1.msra.mxu0 0.0
      %157 = vmatprep.subr.mxu0 0.0
      %158 = vmatpush1.msra.mxu0 0.0
      %159 = vmatprep.subr.mxu0 0.0
      %160 = vmatpush1.msra.mxu0 0.0
      %161 = vmatprep.subr.mxu0 0.0
      %162 = vmatpush1.msra.mxu0 0.0
      %163 = vmatprep.subr.mxu0 0.0
      %164 = vmatpush1.msra.mxu0 0.0
      %165 = vmatprep.subr.mxu0 0.0
      %166 = vmatpush1.msra.mxu0 0.0
      %167 = vmatprep.subr.mxu0 0.0
      %168 = vmatpush1.msra.mxu0 0.0
      %169 = vmatprep.subr.mxu0 0.0
      %170 = vmatpush1.msra.mxu0 0.0
      %171 = vmatprep.subr.mxu0 0.0
      %172 = vmatpush1.msra.mxu0 0.0
      %173 = vmatprep.subr.mxu0 0.0
      %174 = vmatpush1.msra.mxu0 0.0
      %175 = vmatprep.subr.mxu0 0.0
      %176 = vmatpush1.msra.mxu0 0.0
      %177 = vmatprep.subr.mxu0 0.0
      %178 = vmatpush1.msra.mxu0 0.0
      %179 = vmatprep.subr.mxu0 0.0
      %180 = vmatpush1.msra.mxu0 0.0
      %181 = vmatprep.subr.mxu0 0.0
      %182 = vmatpush1.msra.mxu0 0.0
      %183 = vmatprep.subr.mxu0 0.0
      %184 = vmatpush1.msra.mxu0 0.0
      %185 = vmatprep.subr.mxu0 0.0
      %186 = vmatpush1.msra.mxu0 0.0
      %187 = vmatprep.subr.mxu0 0.0
      %188 = vmatpush1.msra.mxu0 0.0
      %189 = vmatprep.subr.mxu0 0.0
      %190 = vmatpush1.msra.mxu0 0.0
      %191 = vmatprep.subr.mxu0 0.0
      %192 = vmatpush1.msra.mxu0 0.0
      %193 = vmatprep.subr.mxu0 0.0
      %194 = vmatpush1.msra.mxu0 0.0
      %195 = vmatprep.subr.mxu0 0.0
      %196 = vmatpush1.msra.mxu0 0.0
      %197 = vmatprep.subr.mxu0 0.0
      %198 = vmatpush1.msra.mxu0 0.0
      %199 = vmatprep.subr.mxu0 0.0
      %200 = vmatpush1.msra.mxu0 0.0
      %201 = vmatprep.subr.mxu0 0.0
      %202 = vmatpush1.msra.mxu0 0.0
      %203 = vmatprep.subr.mxu0 0.0
      %204 = vmatpush1.msra.mxu0 0.0
      %205 = vmatprep.subr.mxu0 0.0
      %206 = vmatpush1.msra.mxu0 0.0
      %207 = vmatprep.subr.mxu0 0.0
      %208 = vmatpush1.msra.mxu0 0.0
      %209 = vmatprep.subr.mxu0 0.0
      %210 = vmatpush1.msra.mxu0 0.0
      %211 = vmatprep.subr.mxu0 0.0
      %212 = vmatpush1.msra.mxu0 0.0
      %213 = vmatprep.mubr.f32.mxu0 0.0
      %214 = vmatmul.mubr.f32.gmra.mrb[0].mxu0 %v144
      %v215 = vpop.f32.mrb[0].mxu0
      %v216 = vadd.f32 0.0, %v215
      %v217 = vpop.f32.mrb[0].mxu0
      %218 = vmatprep.mubr.f32.mxu0 0.0
      %219 = vmatmul.mubr.f32.gmra.mrb[0].mxu0 %v147
      %v220 = vpop.f32.mrb[0].mxu0
      %v221 = vadd.f32 0.0, %v220
      %v222 = vpop.f32.mrb[0].mxu0
      %223 = vdwg.mxu0
      %v224 = vld [vmem:[#allocation5] sm:$0xff]
      %v225 = vld [vmem:[#allocation5 + $0x8] sm:$0xff]
      %v226 = vadd.f32 %v224, %v216
      %v227 = vadd.f32 %v225, %v221
      %v228 = vld [vmem:[%s3] sm:$0x1]
      %v230 = vlaneseq
      %v231 = vshrl.u32 %v230, 7
      %v232 = vsub.s32 0, %v231
      %v233 = vrot.slane %v228, %v232
      %v235 = vadd.f32 %v226, %v233
      %v236 = vadd.f32 %v227, %v233
      %237 = vst.msk [vmem:[#allocation5] sm:$0xff] %vm50, %v235
      %238 = vst.msk [vmem:[#allocation5 + $0x8] sm:$0xff] %vm50, %v236
    $region33: #{tpu_custom_call.1} parent=1 // pred_fallthru
      _
    // Predicated region
    $region34: #{tpu_custom_call.1} parent=1 // pred_check
      _
    $region35: #{tpu_custom_call.1} parent=1 // pred_check_branch
      %240 = sbr.rel (0) target = $region37
    $region36: #{tpu_custom_call.1} parent=1 // pred_region
      %s242 = ssub.s32 256, 256
      %243 = vsyncadd [#allocation4], %s242
      %s244 = sshll.u32 [#allocation5], 4
      %s245 = int_to_ptr.vmem [resolvable:$true] %s244
      %250 = dma.vmem_to_hbm [thread:$0]  %s245, 256, %s5, [#allocation4], 128, 128, 8
    $region37: #{tpu_custom_call.1} parent=1 // pred_fallthru
      _
    // Predicated region
    $region38: #{tpu_custom_call.1} parent=1 // pred_check
      _
    $region39: #{tpu_custom_call.1} parent=1 // pred_check_branch
      %252 = sbr.rel (0) target = $region41
    $region40: #{tpu_custom_call.1} parent=1 // pred_region
      %253 = dma.done [#allocation4], 256
    $region41: #{tpu_custom_call.1} parent=1 // pred_fallthru
      _
    %254 = vsyncpa [#allocation3], 1
    %255 = vsyncpa [#allocation4], 1

</llo_original>
